<compile_context>
chip_gen: v6e
topology: v6e:2x2x1
jax: 0.10.0
libtpu: 0.0.40
codegen_flags: <defaults>
</compile_context>

<pallas_src>
import functools

import jax
import jax.numpy as jnp
from jax import lax
from jax.experimental import pallas as pl
from jax.experimental.pallas import tpu as pltpu


def _round_up(x, m):
    return ((x + m - 1) // m) * m


# -----------------------------------------------------------------------------
# Kernel
# -----------------------------------------------------------------------------
def actor_critic_kernel(x_ref, p_ref, out_ref, *, ni_pad, width, num_outputs):
    x = x_ref[...]                                               # (tile_b, ni_pad)

    # Carve the packed parameter slab with static slices (all row offsets are
    # multiples of 8, all widths multiples of 128).
    w1 = p_ref[0:ni_pad, :]                                      # (ni_pad, width)
    w2 = p_ref[ni_pad:ni_pad + width, :]                         # (width, width)
    w3 = p_ref[ni_pad + width:ni_pad + 2 * width, :]             # (width, width)
    bias = p_ref[ni_pad + 2 * width:ni_pad + 2 * width + 8, :]   # (8, width)
    b1 = bias[0:1, :]
    b2 = bias[1:2, :]
    b3 = bias[2:3, :]

    # Fused layer 1: [actor_fc1 | critic_fc1] ; tanh everywhere (pads stay 0).
    h1 = jnp.tanh(jnp.dot(x, w1, preferred_element_type=jnp.float32) + b1)
    # Fused layer 2: block-diag [actor_fc2 | critic_fc2] ; tanh everywhere.
    # (dropout: identity at inference)
    h2 = jnp.tanh(jnp.dot(h1, w2, preferred_element_type=jnp.float32) + b2)
    # Fused layer 3: block-diag [actor_fc3 | critic_fc3].
    z3 = jnp.dot(h2, w3, preferred_element_type=jnp.float32) + b3
    # tanh only on the actor-mean columns; critic value column stays linear.
    col = lax.broadcasted_iota(jnp.int32, z3.shape, 1)
    out = jnp.where(col < num_outputs, jnp.tanh(z3), z3)
    out_ref[...] = out.astype(out_ref.dtype)                     # one lane-dense store


# -----------------------------------------------------------------------------
# Parameter packing (done once, outside the per-step call)
# -----------------------------------------------------------------------------
def pack_params(params, num_inputs, hid_num, num_outputs):
    """Pack all weights/biases into one (rows, width) f32 slab."""
    ni_pad = _round_up(num_inputs, 8)
    width = max(128,
                _round_up(32 + 64, 128),
                _round_up(hid_num + 64, 128),
                _round_up(num_outputs + 1, 128))

    # Layer 1: columns [0:32]=actor, [32:96]=critic.
    w1 = jnp.zeros((ni_pad, width), jnp.float32)
    w1 = w1.at[:num_inputs, 0:32].set(params["wa1"])
    w1 = w1.at[:num_inputs, 32:96].set(params["wc1"])
    b1 = jnp.zeros((width,), jnp.float32)
    b1 = b1.at[0:32].set(params["ba1"].reshape(-1))
    b1 = b1.at[32:96].set(params["bc1"].reshape(-1))

    # Layer 2: block diagonal.
    w2 = jnp.zeros((width, width), jnp.float32)
    w2 = w2.at[0:32, 0:hid_num].set(params["wa2"])
    w2 = w2.at[32:96, hid_num:hid_num + 64].set(params["wc2"])
    b2 = jnp.zeros((width,), jnp.float32)
    b2 = b2.at[0:hid_num].set(params["ba2"].reshape(-1))
    b2 = b2.at[hid_num:hid_num + 64].set(params["bc2"].reshape(-1))

    # Layer 3: block diagonal; value lives in column `num_outputs`.
    w3 = jnp.zeros((width, width), jnp.float32)
    w3 = w3.at[0:hid_num, 0:num_outputs].set(params["wa3"])
    w3 = w3.at[hid_num:hid_num + 64, num_outputs:num_outputs + 1].set(params["wc3"])
    b3 = jnp.zeros((width,), jnp.float32)
    b3 = b3.at[0:num_outputs].set(params["ba3"].reshape(-1))
    b3 = b3.at[num_outputs:num_outputs + 1].set(params["bc3"].reshape(-1))

    bias = jnp.zeros((8, width), jnp.float32)
    bias = bias.at[0].set(b1).at[1].set(b2).at[2].set(b3)

    slab = jnp.concatenate([w1, w2, w3, bias], axis=0)   # (ni_pad + 2*width + 8, width)
    return slab, ni_pad, width


# -----------------------------------------------------------------------------
# Wrapper
# -----------------------------------------------------------------------------
def actor_critic_forward(states, slab, logstd, *, ni_pad, width, num_outputs,
                         tile_b=512):
    """states: [B, num_inputs] f32.  Returns (action_mean, action_logstd, value)."""
    B, ni = states.shape
    x = states if ni == ni_pad else jnp.pad(states, ((0, 0), (0, ni_pad - ni)))

    kernel = functools.partial(actor_critic_kernel, ni_pad=ni_pad, width=width,
                               num_outputs=num_outputs)
    vmem = pl.BlockSpec(memory_space=pltpu.MemorySpace.VMEM)

    if B <= tile_b:
        # Tiny batch: single invocation, everything resident in VMEM.
        out = pl.pallas_call(
            kernel,
            out_shape=jax.ShapeDtypeStruct((B, width), jnp.float32),
            in_specs=[vmem, vmem],
            out_specs=vmem,
        )(x, slab)
    else:
        # Large batch: 1-D grid over batch tiles; params stay VMEM-resident
        # (constant index_map); batch axis marked parallel (megacore on v7x).
        bp = _round_up(B, tile_b)
        if bp != B:
            x = jnp.pad(x, ((0, bp - B), (0, 0)))
        out = pl.pallas_call(
            kernel,
            out_shape=jax.ShapeDtypeStruct((bp, width), jnp.float32),
            grid_spec=pltpu.PrefetchScalarGridSpec(
                num_scalar_prefetch=0,
                grid=(bp // tile_b,),
                in_specs=[
                    pl.BlockSpec((tile_b, ni_pad), lambda i: (i, 0)),
                    pl.BlockSpec((slab.shape[0], width), lambda i: (0, 0)),
                ],
                out_specs=pl.BlockSpec((tile_b, width), lambda i: (i, 0)),
            ),
            compiler_params=pltpu.CompilerParams(
                dimension_semantics=("parallel",)),
        )(x, slab)
        out = out[:B]

    action_mean = out[:, :num_outputs]
    critic_value = out[:, num_outputs:num_outputs + 1]
    # action_logstd = self.actor_logstd.expand_as(action_mean): pure parameter
    # broadcast -> done outside the kernel (XLA fuses it).
    action_logstd = jnp.broadcast_to(logstd, (B, num_outputs))
    return action_mean, action_logstd, critic_value


# -----------------------------------------------------------------------------
# Init (mimics torch.nn.init.orthogonal_ + constant bias)
# -----------------------------------------------------------------------------
def _orthogonal(key, shape, gain):
    rows, cols = shape
    flat = jax.random.normal(key, (max(rows, cols), min(rows, cols)), jnp.float32)
    q, r = jnp.linalg.qr(flat)
    q = q * jnp.sign(jnp.diag(r))          # make decomposition unique
    q = q[:rows, :cols] if rows >= cols else q.T[:rows, :cols]
    return gain * q


def init_params(key, num_inputs, hid_num, num_outputs):
    ks = jax.random.split(key, 6)
    # Weights stored as (in, out) == (PyTorch weight).T ; biases zero (bias_const=0).
    params = {
        "wa1": _orthogonal(ks[0], (32, num_inputs), 1.0).T,         # (num_inputs, 32)
        "ba1": jnp.zeros((1, 32), jnp.float32),
        "wa2": _orthogonal(ks[1], (hid_num, 32), 1.0).T,            # (32, hid_num)
        "ba2": jnp.zeros((1, hid_num), jnp.float32),
        "wa3": _orthogonal(ks[2], (num_outputs, hid_num), 0.01).T,  # (hid_num, num_outputs)
        "ba3": jnp.zeros((1, num_outputs), jnp.float32),
        "logstd": jnp.zeros((1, num_outputs), jnp.float32),         # nn.Parameter(zeros)
        "wc1": _orthogonal(ks[3], (64, num_inputs), 1.0).T,         # (num_inputs, 64)
        "bc1": jnp.zeros((1, 64), jnp.float32),
        "wc2": _orthogonal(ks[4], (64, 64), 1.0).T,                 # (64, 64)
        "bc2": jnp.zeros((1, 64), jnp.float32),
        "wc3": _orthogonal(ks[5], (1, 64), 1.0).T,                  # (64, 1)
        "bc3": jnp.zeros((1, 1), jnp.float32),
    }
    return params


if __name__ == "__main__":
    B, NUM_INPUTS, HID_NUM, NUM_OUTPUTS = 8, 8, 32, 4

    key = jax.random.PRNGKey(0)
    k_x, k_p, k_big = jax.random.split(key, 3)

    states = jax.random.normal(k_x, (B, NUM_INPUTS), jnp.float32)
    params = init_params(k_p, NUM_INPUTS, HID_NUM, NUM_OUTPUTS)
    slab, NI_PAD, WIDTH = pack_params(params, NUM_INPUTS, HID_NUM, NUM_OUTPUTS)
    slab = jax.block_until_ready(slab)

    # Pure-JAX reference.
    def ref(x, p):
        h = jnp.tanh(x @ p["wa1"] + p["ba1"])
        h = jnp.tanh(h @ p["wa2"] + p["ba2"])
        mean = jnp.tanh(h @ p["wa3"] + p["ba3"])
        logstd = jnp.broadcast_to(p["logstd"], mean.shape)
        c = jnp.tanh(x @ p["wc1"] + p["bc1"])
        c = jnp.tanh(c @ p["wc2"] + p["bc2"])
        v = c @ p["wc3"] + p["bc3"]
        return mean, logstd, v

    # --- small-batch path (single invocation) ---
    action_mean, action_logstd, critic_value = actor_critic_forward(
        states, slab, params["logstd"],
        ni_pad=NI_PAD, width=WIDTH, num_outputs=NUM_OUTPUTS)
    jax.block_until_ready((action_mean, action_logstd, critic_value))

    rm, rl, rv = ref(states, params)
    assert action_mean.shape == (B, NUM_OUTPUTS)
    assert action_logstd.shape == (B, NUM_OUTPUTS)
    assert critic_value.shape == (B, 1)
    assert jnp.allclose(action_mean, rm, atol=1e-5)
    assert jnp.allclose(action_logstd, rl, atol=1e-6)
    assert jnp.allclose(critic_value, rv, atol=1e-5)

    # --- large-batch path (1-D batch grid, weights resident) ---
    BIG_B = 1024
    big_states = jax.random.normal(k_big, (BIG_B, NUM_INPUTS), jnp.float32)
    bm, bl, bv = actor_critic_forward(
        big_states, slab, params["logstd"],
        ni_pad=NI_PAD, width=WIDTH, num_outputs=NUM_OUTPUTS, tile_b=512)
    jax.block_until_ready((bm, bl, bv))

    rbm, rbl, rbv = ref(big_states, params)
    assert bm.shape == (BIG_B, NUM_OUTPUTS)
    assert bv.shape == (BIG_B, 1)
    assert jnp.allclose(bm, rbm, atol=1e-5)
    assert jnp.allclose(bl, rbl, atol=1e-6)
    assert jnp.allclose(bv, rbv, atol=1e-5)

    print("KERNEL_OK")
</pallas_src>

<mosaic_0001>
module attributes {stable_mosaic.version = 11 : i64} {
  func.func @actor_critic_kernel(%arg0: memref<8x8xf32, #tpu.memory_space<vmem>>, %arg1: memref<272x128xf32, #tpu.memory_space<vmem>>, %arg2: memref<8x128xf32, #tpu.memory_space<vmem>>) attributes {dimension_semantics = [], scalar_prefetch = 0 : i64, scratch_operands = 0 : i64, tpu.core_type = #tpu.core_type<tc>} {
    %c0 = arith.constant 0 : index
    %c0_0 = arith.constant 0 : index
    %0 = vector.load %arg0[%c0, %c0_0] : memref<8x8xf32, #tpu.memory_space<vmem>>, vector<8x8xf32>
    %c0_1 = arith.constant 0 : index
    %c0_2 = arith.constant 0 : index
    %1 = vector.load %arg1[%c0_1, %c0_2] : memref<272x128xf32, #tpu.memory_space<vmem>>, vector<8x128xf32>
    %c8 = arith.constant 8 : index
    %c0_3 = arith.constant 0 : index
    %2 = vector.load %arg1[%c8, %c0_3] : memref<272x128xf32, #tpu.memory_space<vmem>>, vector<128x128xf32>
    %c136 = arith.constant 136 : index
    %c0_4 = arith.constant 0 : index
    %3 = vector.load %arg1[%c136, %c0_4] : memref<272x128xf32, #tpu.memory_space<vmem>>, vector<128x128xf32>
    %c264 = arith.constant 264 : index
    %c0_5 = arith.constant 0 : index
    %4 = vector.load %arg1[%c264, %c0_5] : memref<272x128xf32, #tpu.memory_space<vmem>>, vector<8x128xf32>
    %5 = vector.extract_strided_slice %4 {offsets = [0, 0], sizes = [1, 128], strides = [1, 1]} : vector<8x128xf32> to vector<1x128xf32>
    %6 = vector.extract_strided_slice %4 {offsets = [1, 0], sizes = [1, 128], strides = [1, 1]} : vector<8x128xf32> to vector<1x128xf32>
    %7 = vector.extract_strided_slice %4 {offsets = [2, 0], sizes = [1, 128], strides = [1, 1]} : vector<8x128xf32> to vector<1x128xf32>
    %cst = arith.constant dense<0.000000e+00> : vector<8x128xf32>
    %8 = tpu.matmul %0, %1, %cst {dimension_numbers = #tpu.dot_dimension_numbers<[1], [0], [0], [1], [0, 0, 1, 1], [], []>} : vector<8x8xf32>, vector<8x128xf32>, vector<8x128xf32> -> vector<8x128xf32>
    %9 = vector.broadcast %5 : vector<1x128xf32> to vector<8x128xf32>
    %10 = arith.addf %8, %9 : vector<8x128xf32>
    %11 = math.tanh %10 : vector<8x128xf32>
    %cst_6 = arith.constant dense<0.000000e+00> : vector<8x128xf32>
    %12 = tpu.matmul %11, %2, %cst_6 {dimension_numbers = #tpu.dot_dimension_numbers<[1], [0], [0], [1], [0, 0, 1, 1], [], []>} : vector<8x128xf32>, vector<128x128xf32>, vector<8x128xf32> -> vector<8x128xf32>
    %13 = vector.broadcast %6 : vector<1x128xf32> to vector<8x128xf32>
    %14 = arith.addf %12, %13 : vector<8x128xf32>
    %15 = math.tanh %14 : vector<8x128xf32>
    %cst_7 = arith.constant dense<0.000000e+00> : vector<8x128xf32>
    %16 = tpu.matmul %15, %3, %cst_7 {dimension_numbers = #tpu.dot_dimension_numbers<[1], [0], [0], [1], [0, 0, 1, 1], [], []>} : vector<8x128xf32>, vector<128x128xf32>, vector<8x128xf32> -> vector<8x128xf32>
    %17 = vector.broadcast %7 : vector<1x128xf32> to vector<8x128xf32>
    %18 = arith.addf %16, %17 : vector<8x128xf32>
    %19 = tpu.iota {dimensions = array<i32: 1>} : vector<8x128xi32>
    %c4_i32 = arith.constant 4 : i32
    %20 = vector.broadcast %c4_i32 : i32 to vector<8x128xi32>
    %21 = arith.cmpi slt, %19, %20 : vector<8x128xi32>
    %22 = math.tanh %18 : vector<8x128xf32>
    %23 = arith.select %21, %22, %18 : vector<8x128xi1>, vector<8x128xf32>
    %c0_8 = arith.constant 0 : index
    %c0_9 = arith.constant 0 : index
    %24 = vector.load %arg2[%c0_8, %c0_9] : memref<8x128xf32, #tpu.memory_space<vmem>>, vector<8x128xf32>
    tpu.vector_store %arg2[%c0_8, %c0_9], %23 {strides = array<i32>} : memref<8x128xf32, #tpu.memory_space<vmem>>, vector<8x128xf32>,
    return
  }
}

</mosaic_0001>

<llo_original>
// kernel: tpu_custom_call.1
$region0: #{tpu_custom_call.1}
  #allocation0 [shape = 'u32[]', space=smem, size = 0x4, offset = 0x4, fixed_abs, tag = 'smem constant byte address 0x4 - core index']
  #allocation1 [shape = 'u32[144,128]{1,0:T(1,128)}', space=vmem, size = 0x12000, scoped, tag = 'internal scratch']
  %s0 = inlined_call_operand.hbm [shape: f32[8,8], index: 0, kind: input, shape index: {}]
  %s1 = inlined_call_operand.hbm [shape: f32[272,128], index: 1, kind: input, shape index: {}]
  %s2 = inlined_call_operand.hbm [shape: f32[8,128], index: 2, kind: output, shape index: {}]
  %s3 = sld [smem:[#allocation0]]
  $region26: #{tpu_custom_call.1} parent=0
    _
  %s5 = ssub.s32 1, %s3
  %s6 = scalar_select 0, %s5, %s3
  $region1: #{tpu_custom_call.1} parent=0
    #allocation2 [shape = 'u8[4096]{0}', space=vmem, size = 0x1000, scoped, tag = 'input window, operand 0, single buffered']
    #allocation3 [shape = 's32[1]{0}', space=sflag, size = 0x4, scoped, tag = 'scoped memory for tpu_custom_call.1']
    #allocation4 [shape = 's32[1]{0}', space=sflag, size = 0x4, scoped, tag = 'scoped memory for tpu_custom_call.1']
    #allocation5 [shape = 'u8[139264]{0}', space=vmem, size = 0x22000, scoped, tag = 'input window, operand 1, single buffered']
    #allocation6 [shape = 's32[1]{0}', space=sflag, size = 0x4, scoped, tag = 'scoped memory for tpu_custom_call.1']
    #allocation7 [shape = 'u8[4096]{0}', space=vmem, size = 0x1000, scoped, tag = 'output window, operand 0, single buffered']
    %7 = vsyncpa [#allocation3], 0
    %8 = vsyncpa [#allocation6], 0
    %9 = vsyncpa [#allocation4], 0
    // Predicated region
    $region2: #{tpu_custom_call.1} parent=1 // pred_check
      _
    $region3: #{tpu_custom_call.1} parent=1 // pred_check_branch
      %11 = sbr.rel (0) target = $region5
    $region4: #{tpu_custom_call.1} parent=1 // pred_region
      %s13 = ssub.s32 128, 128
      %14 = vsyncadd [#allocation3], %s13
      %s16 = sshll.u32 [#allocation2], 4
      %s17 = int_to_ptr.vmem [resolvable:$true] %s16
      %19 = dma.hbm_to_vmem [thread:$0]  %s0, 128, %s17, [#allocation3]
    $region5: #{tpu_custom_call.1} parent=1 // pred_fallthru
      _
    // Predicated region
    $region6: #{tpu_custom_call.1} parent=1 // pred_check
      _
    $region7: #{tpu_custom_call.1} parent=1 // pred_check_branch
      %21 = sbr.rel (0) target = $region9
    $region8: #{tpu_custom_call.1} parent=1 // pred_region
      %s23 = ssub.s32 4352, 4352
      %24 = vsyncadd [#allocation6], %s23
      %s25 = sshll.u32 [#allocation5], 4
      %s26 = int_to_ptr.vmem [resolvable:$true] %s25
      %31 = dma.hbm_to_vmem [thread:$0]  %s1, 4352, %s26, [#allocation6], 128, 128, 8
    $region9: #{tpu_custom_call.1} parent=1 // pred_fallthru
      _
    // Predicated region
    $region10: #{tpu_custom_call.1} parent=1 // pred_check
      _
    $region11: #{tpu_custom_call.1} parent=1 // pred_check_branch
      %33 = sbr.rel (0) target = $region13
    $region12: #{tpu_custom_call.1} parent=1 // pred_region
      %34 = dma.done [#allocation3], 128
    $region13: #{tpu_custom_call.1} parent=1 // pred_fallthru
      _
    // Predicated region
    $region14: #{tpu_custom_call.1} parent=1 // pred_check
      _
    $region15: #{tpu_custom_call.1} parent=1 // pred_check_branch
      %36 = sbr.rel (0) target = $region17
    $region16: #{tpu_custom_call.1} parent=1 // pred_region
      %37 = dma.done [#allocation6], 4352
    $region17: #{tpu_custom_call.1} parent=1 // pred_fallthru
      _
    %v38 = vld [vmem:[#allocation2] sm:$0xff]
    %v39 = vld [vmem:[#allocation5] sm:$0xff]
    %v40 = vld [vmem:[#allocation5 + $0x8] sm:$0xff]
    %v41 = vld [vmem:[#allocation5 + $0x10] sm:$0xff]
    %v42 = vld [vmem:[#allocation5 + $0x18] sm:$0xff]
    %v43 = vld [vmem:[#allocation5 + $0x20] sm:$0xff]
    %v44 = vld [vmem:[#allocation5 + $0x28] sm:$0xff]
    %v45 = vld [vmem:[#allocation5 + $0x30] sm:$0xff]
    %v46 = vld [vmem:[#allocation5 + $0x38] sm:$0xff]
    %v47 = vld [vmem:[#allocation5 + $0x40] sm:$0xff]
    %v48 = vld [vmem:[#allocation5 + $0x48] sm:$0xff]
    %v49 = vld [vmem:[#allocation5 + $0x50] sm:$0xff]
    %v50 = vld [vmem:[#allocation5 + $0x58] sm:$0xff]
    %v51 = vld [vmem:[#allocation5 + $0x60] sm:$0xff]
    %v52 = vld [vmem:[#allocation5 + $0x68] sm:$0xff]
    %v53 = vld [vmem:[#allocation5 + $0x70] sm:$0xff]
    %v54 = vld [vmem:[#allocation5 + $0x78] sm:$0xff]
    %v55 = vld [vmem:[#allocation5 + $0x80] sm:$0xff]
    %v56 = vld [vmem:[#allocation5 + $0x88] sm:$0xff]
    %v57 = vld [vmem:[#allocation5 + $0x90] sm:$0xff]
    %v58 = vld [vmem:[#allocation5 + $0x98] sm:$0xff]
    %v59 = vld [vmem:[#allocation5 + $0xa0] sm:$0xff]
    %v60 = vld [vmem:[#allocation5 + $0xa8] sm:$0xff]
    %v61 = vld [vmem:[#allocation5 + $0xb0] sm:$0xff]
    %v62 = vld [vmem:[#allocation5 + $0xb8] sm:$0xff]
    %v63 = vld [vmem:[#allocation5 + $0xc0] sm:$0xff]
    %v64 = vld [vmem:[#allocation5 + $0xc8] sm:$0xff]
    %v65 = vld [vmem:[#allocation5 + $0xd0] sm:$0xff]
    %v66 = vld [vmem:[#allocation5 + $0xd8] sm:$0xff]
    %v67 = vld [vmem:[#allocation5 + $0xe0] sm:$0xff]
    %v68 = vld [vmem:[#allocation5 + $0xe8] sm:$0xff]
    %v69 = vld [vmem:[#allocation5 + $0xf0] sm:$0xff]
    %v70 = vld [vmem:[#allocation5 + $0xf8] sm:$0xff]
    %v71 = vld [vmem:[#allocation5 + $0x100] sm:$0xff]
    %v72 = vld [vmem:[#allocation5 + $0x108] sm:$0xff]
    %v73 = vlaneseq
    %v74 = vshrl.u32 %v73, 7
    %v75 = vsub.s32 0, %v74
    %v76 = vrot.slane %v72, %v75
    %vm77 = vcmask 64512
    %v79 = vsel %vm77, %v38, 0
    %81 = vmatprep.subr.mxu0 0.0
    %82 = vmatpush1.msra.mxu0 0.0
    %83 = vmatprep.subr.mxu0 0.0
    %84 = vmatpush1.msra.mxu0 0.0
    %85 = vmatprep.subr.mxu0 0.0
    %86 = vmatpush1.msra.mxu0 0.0
    %87 = vmatprep.subr.mxu0 0.0
    %88 = vmatpush1.msra.mxu0 0.0
    %89 = vmatprep.subr.mxu0 0.0
    %90 = vmatpush1.msra.mxu0 0.0
    %91 = vmatprep.subr.mxu0 0.0
    %92 = vmatpush1.msra.mxu0 0.0
    %93 = vmatprep.subr.mxu0 0.0
    %94 = vmatpush1.msra.mxu0 0.0
    %95 = vmatprep.subr.mxu0 0.0
    %96 = vmatpush1.msra.mxu0 0.0
    %97 = vmatprep.subr.mxu0 0.0
    %98 = vmatpush1.msra.mxu0 0.0
    %99 = vmatprep.subr.mxu0 0.0
    %100 = vmatpush1.msra.mxu0 0.0
    %101 = vmatprep.subr.mxu0 0.0
    %102 = vmatpush1.msra.mxu0 0.0
    %103 = vmatprep.subr.mxu0 0.0
    %104 = vmatpush1.msra.mxu0 0.0
    %105 = vmatprep.subr.mxu0 0.0
    %106 = vmatpush1.msra.mxu0 0.0
    %107 = vmatprep.subr.mxu0 0.0
    %108 = vmatpush1.msra.mxu0 0.0
    %109 = vmatprep.subr.mxu0 0.0
    %110 = vmatpush1.msra.mxu0 0.0
    %111 = vmatprep.subr.mxu0 0.0
    %112 = vmatpush1.msra.mxu0 %v39
    %113 = vmatprep.subr.mxu0 0.0
    %114 = vmatpush2.msra.mxu0 0.0
    %115 = vmatprep.subr.mxu0 0.0
    %116 = vmatpush2.msra.mxu0 0.0
    %117 = vmatprep.subr.mxu0 0.0
    %118 = vmatpush2.msra.mxu0 0.0
    %119 = vmatprep.subr.mxu0 0.0
    %120 = vmatpush2.msra.mxu0 0.0
    %121 = vmatprep.subr.mxu0 0.0
    %122 = vmatpush2.msra.mxu0 0.0
    %123 = vmatprep.subr.mxu0 0.0
    %124 = vmatpush2.msra.mxu0 0.0
    %125 = vmatprep.subr.mxu0 0.0
    %126 = vmatpush2.msra.mxu0 0.0
    %127 = vmatprep.subr.mxu0 0.0
    %128 = vmatpush2.msra.mxu0 0.0
    %129 = vmatprep.subr.mxu0 0.0
    %130 = vmatpush2.msra.mxu0 0.0
    %131 = vmatprep.subr.mxu0 0.0
    %132 = vmatpush2.msra.mxu0 0.0
    %133 = vmatprep.subr.mxu0 0.0
    %134 = vmatpush2.msra.mxu0 0.0
    %135 = vmatprep.subr.mxu0 0.0
    %136 = vmatpush2.msra.mxu0 0.0
    %137 = vmatprep.subr.mxu0 0.0
    %138 = vmatpush2.msra.mxu0 0.0
    %139 = vmatprep.subr.mxu0 0.0
    %140 = vmatpush2.msra.mxu0 0.0
    %141 = vmatprep.subr.mxu0 0.0
    %142 = vmatpush2.msra.mxu0 0.0
    %143 = vmatprep.subr.mxu0 0.0
    %144 = vmatpush2.msra.mxu0 0.0
    %145 = vmatprep.mubr.f32.mxu0 0.0
    %146 = vmatmul.mubr.f32.gmra.mxu0 %v79
    %v147 = vpop.f32.mrf.mxu0
    %v148 = vadd.f32 %v76, %v147
    %v149 = vpop.f32.mrf.mxu0
    %150 = vdwg.mxu0
    %v151 = vtanh.pop %v148
    %v152 = vlaneseq
    %v153 = vshrl.u32 %v152, 7
    %v154 = vsub.s32 1, %v153
    %v155 = vrot.slane %v72, %v154
    %156 = vmatprep.subr.mxu0 0.0
    %157 = vmatpush1.msra.mxu0 %v55
    %158 = vmatprep.subr.mxu0 0.0
    %159 = vmatpush1.msra.mxu0 %v54
    %160 = vmatprep.subr.mxu0 0.0
    %161 = vmatpush1.msra.mxu0 %v53
    %162 = vmatprep.subr.mxu0 0.0
    %163 = vmatpush1.msra.mxu0 %v52
    %164 = vmatprep.subr.mxu0 0.0
    %165 = vmatpush1.msra.mxu0 %v51
    %166 = vmatprep.subr.mxu0 0.0
    %167 = vmatpush1.msra.mxu0 %v50
    %168 = vmatprep.subr.mxu0 0.0
    %169 = vmatpush1.msra.mxu0 %v49
    %170 = vmatprep.subr.mxu0 0.0
    %171 = vmatpush1.msra.mxu0 %v48
    %172 = vmatprep.subr.mxu0 0.0
    %173 = vmatpush1.msra.mxu0 %v47
    %174 = vmatprep.subr.mxu0 0.0
    %175 = vmatpush1.msra.mxu0 %v46
    %176 = vmatprep.subr.mxu0 0.0
    %177 = vmatpush1.msra.mxu0 %v45
    %178 = vmatprep.subr.mxu0 0.0
    %179 = vmatpush1.msra.mxu0 %v44
    %180 = vmatprep.subr.mxu0 0.0
    %181 = vmatpush1.msra.mxu0 %v43
    %182 = vmatprep.subr.mxu0 0.0
    %183 = vmatpush1.msra.mxu0 %v42
    %184 = vmatprep.subr.mxu0 0.0
    %185 = vmatpush1.msra.mxu0 %v41
    %186 = vmatprep.subr.mxu0 0.0
    %187 = vmatpush1.msra.mxu0 %v40
    %188 = vmatprep.subr.mxu0 0.0
    %189 = vmatpush2.msra.mxu0 0.0
    %190 = vmatprep.subr.mxu0 0.0
    %191 = vmatpush2.msra.mxu0 0.0
    %192 = vmatprep.subr.mxu0 0.0
    %193 = vmatpush2.msra.mxu0 0.0
    %194 = vmatprep.subr.mxu0 0.0
    %195 = vmatpush2.msra.mxu0 0.0
    %196 = vmatprep.subr.mxu0 0.0
    %197 = vmatpush2.msra.mxu0 0.0
    %198 = vmatprep.subr.mxu0 0.0
    %199 = vmatpush2.msra.mxu0 0.0
    %200 = vmatprep.subr.mxu0 0.0
    %201 = vmatpush2.msra.mxu0 0.0
    %202 = vmatprep.subr.mxu0 0.0
    %203 = vmatpush2.msra.mxu0 0.0
    %204 = vmatprep.subr.mxu0 0.0
    %205 = vmatpush2.msra.mxu0 0.0
    %206 = vmatprep.subr.mxu0 0.0
    %207 = vmatpush2.msra.mxu0 0.0
    %208 = vmatprep.subr.mxu0 0.0
    %209 = vmatpush2.msra.mxu0 0.0
    %210 = vmatprep.subr.mxu0 0.0
    %211 = vmatpush2.msra.mxu0 0.0
    %212 = vmatprep.subr.mxu0 0.0
    %213 = vmatpush2.msra.mxu0 0.0
    %214 = vmatprep.subr.mxu0 0.0
    %215 = vmatpush2.msra.mxu0 0.0
    %216 = vmatprep.subr.mxu0 0.0
    %217 = vmatpush2.msra.mxu0 0.0
    %218 = vmatprep.subr.mxu0 0.0
    %219 = vmatpush2.msra.mxu0 0.0
    %220 = vmatprep.mubr.f32.mxu0 0.0
    %221 = vmatmul.mubr.f32.gmra.mxu0 %v151
    %v222 = vpop.f32.mrf.mxu0
    %v223 = vadd.f32 %v155, %v222
    %v224 = vpop.f32.mrf.mxu0
    %225 = vdwg.mxu0
    %v226 = vtanh.pop %v223
    %v227 = vlaneseq
    %v228 = vshrl.u32 %v227, 7
    %v229 = vsub.s32 2, %v228
    %v230 = vrot.slane %v72, %v229
    %231 = vmatprep.subr.mxu0 0.0
    %232 = vmatpush1.msra.mxu0 %v71
    %233 = vmatprep.subr.mxu0 0.0
    %234 = vmatpush1.msra.mxu0 %v70
    %235 = vmatprep.subr.mxu0 0.0
    %236 = vmatpush1.msra.mxu0 %v69
    %237 = vmatprep.subr.mxu0 0.0
    %238 = vmatpush1.msra.mxu0 %v68
    %239 = vmatprep.subr.mxu0 0.0
    %240 = vmatpush1.msra.mxu0 %v67
    %241 = vmatprep.subr.mxu0 0.0
    %242 = vmatpush1.msra.mxu0 %v66
    %243 = vmatprep.subr.mxu0 0.0
    %244 = vmatpush1.msra.mxu0 %v65
    %245 = vmatprep.subr.mxu0 0.0
    %246 = vmatpush1.msra.mxu0 %v64
    %247 = vmatprep.subr.mxu0 0.0
    %248 = vmatpush1.msra.mxu0 %v63
    %249 = vmatprep.subr.mxu0 0.0
    %250 = vmatpush1.msra.mxu0 %v62
    %251 = vmatprep.subr.mxu0 0.0
    %252 = vmatpush1.msra.mxu0 %v61
    %253 = vmatprep.subr.mxu0 0.0
    %254 = vmatpush1.msra.mxu0 %v60
    %255 = vmatprep.subr.mxu0 0.0
    %256 = vmatpush1.msra.mxu0 %v59
    %257 = vmatprep.subr.mxu0 0.0
    %258 = vmatpush1.msra.mxu0 %v58
    %259 = vmatprep.subr.mxu0 0.0
    %260 = vmatpush1.msra.mxu0 %v57
    %261 = vmatprep.subr.mxu0 0.0
    %262 = vmatpush1.msra.mxu0 %v56
    %263 = vmatprep.subr.mxu0 0.0
    %264 = vmatpush2.msra.mxu0 0.0
    %265 = vmatprep.subr.mxu0 0.0
    %266 = vmatpush2.msra.mxu0 0.0
    %267 = vmatprep.subr.mxu0 0.0
    %268 = vmatpush2.msra.mxu0 0.0
    %269 = vmatprep.subr.mxu0 0.0
    %270 = vmatpush2.msra.mxu0 0.0
    %271 = vmatprep.subr.mxu0 0.0
    %272 = vmatpush2.msra.mxu0 0.0
    %273 = vmatprep.subr.mxu0 0.0
    %274 = vmatpush2.msra.mxu0 0.0
    %275 = vmatprep.subr.mxu0 0.0
    %276 = vmatpush2.msra.mxu0 0.0
    %277 = vmatprep.subr.mxu0 0.0
    %278 = vmatpush2.msra.mxu0 0.0
    %279 = vmatprep.subr.mxu0 0.0
    %280 = vmatpush2.msra.mxu0 0.0
    %281 = vmatprep.subr.mxu0 0.0
    %282 = vmatpush2.msra.mxu0 0.0
    %283 = vmatprep.subr.mxu0 0.0
    %284 = vmatpush2.msra.mxu0 0.0
    %285 = vmatprep.subr.mxu0 0.0
    %286 = vmatpush2.msra.mxu0 0.0
    %287 = vmatprep.subr.mxu0 0.0
    %288 = vmatpush2.msra.mxu0 0.0
    %289 = vmatprep.subr.mxu0 0.0
    %290 = vmatpush2.msra.mxu0 0.0
    %291 = vmatprep.subr.mxu0 0.0
    %292 = vmatpush2.msra.mxu0 0.0
    %293 = vmatprep.subr.mxu0 0.0
    %294 = vmatpush2.msra.mxu0 0.0
    %295 = vmatprep.mubr.f32.mxu0 0.0
    %296 = vmatmul.mubr.f32.gmra.mxu0 %v226
    %v297 = vpop.f32.mrf.mxu0
    %v298 = vadd.f32 %v230, %v297
    %v299 = vpop.f32.mrf.mxu0
    %300 = vdwg.mxu0
    %v301 = vlaneseq
    %v302 = vand.u32 %v301, 127
    %vm303 = vcmp.lt.s32.totalorder %v302, 4
    %v304 = vtanh.pop %v298
    %v305 = vsel %vm303, %v304, %v298
    %306 = vst [vmem:[#allocation7] sm:$0xff] %v305
    // Predicated region
    $region18: #{tpu_custom_call.1} parent=1 // pred_check
      _
    $region19: #{tpu_custom_call.1} parent=1 // pred_check_branch
      %308 = sbr.rel (0) target = $region21
    $region20: #{tpu_custom_call.1} parent=1 // pred_region
      %s310 = ssub.s32 128, 128
      %311 = vsyncadd [#allocation4], %s310
      %s313 = sshll.u32 [#allocation7], 4
      %s314 = int_to_ptr.vmem [resolvable:$true] %s313
      %316 = dma.vmem_to_hbm [thread:$0]  %s314, 128, %s2, [#allocation4]
    $region21: #{tpu_custom_call.1} parent=1 // pred_fallthru
      _
    // Predicated region
    $region22: #{tpu_custom_call.1} parent=1 // pred_check
      _
    $region23: #{tpu_custom_call.1} parent=1 // pred_check_branch
      %318 = sbr.rel (0) target = $region25
    $region24: #{tpu_custom_call.1} parent=1 // pred_region
      %319 = dma.done [#allocation4], 128
    $region25: #{tpu_custom_call.1} parent=1 // pred_fallthru
      _
    %320 = vsyncpa [#allocation3], 1
    %321 = vsyncpa [#allocation6], 1
    %322 = vsyncpa [#allocation4], 1

</llo_original>
